<compile_context>
chip_gen: v7x
topology: tpu7x:2x2x1
jax: 0.10.0
libtpu: 0.0.40
codegen_flags: <defaults>
</compile_context>

<pallas_src>
import functools

import jax
import jax.numpy as jnp
from jax.experimental import pallas as pl
from jax.experimental.pallas import tpu as pltpu


def _round_up(x, m):
    return ((x + m - 1) // m) * m


def _vmem_budget_bytes():
    """~85% of this generation's VMEM capacity (headroom for Mosaic scratch)."""
    cap = 64 << 20  # conservative fallback (v7x physical per-TC VMEM)
    try:
        info = pltpu.get_tpu_info()
        cap = int(getattr(info, "vmem_capacity_bytes", cap)) or cap
    except Exception:
        pass
    return int(cap * 0.85)


def _pick_h_tile(H, target, min_tile=128):
    """Hidden-dim tile. Returns (th, H_padded). Never falls back to th == H for
    large H; zero-pads H instead (mathematically exact for SwiGLU)."""
    if H <= min_tile:
        return H, H
    t = max(min_tile, (min(target, H) // min_tile) * min_tile)
    for cand in range(t, min_tile - 1, -min_tile):
        if H % cand == 0:
            return cand, H
    return t, _round_up(H, t)


def _pick_m_tile(M, target):
    tm = min(target, M)
    # Keep >= 2 row tiles when feasible so the "parallel" M axis can be
    # sharded across TensorCores (v7x has 2 TCs/chip; megacore on v5e/v6e).
    if tm == M and M >= 512:
        tm = min(M, _round_up(pl.cdiv(M, 2), 128))
    return tm


def _footprint_bytes(tm, th, D, itemsize):
    per_buf = (tm * D * itemsize         # x tile
               + D * 2 * th * itemsize   # fused w1|w3 tile
               + th * 4                  # b3 tile (f32)
               + th * D * itemsize       # w2 tile
               + D * 4                   # b2 (f32)
               + tm * D * itemsize)      # out tile
    return 2 * per_buf + tm * D * 4      # double buffering + f32 accumulator


def _choose_tiles(M, D, H, itemsize, budget):
    # Big-VMEM chips (v5e/v6e, 128 MiB): large row tile so arithmetic intensity
    # (~tm flops/byte on streamed weights) clears the compute/HBM crossover.
    # Small-VMEM (v7x, 64 MiB physical): tm=512 / th=256 fits with headroom.
    if budget >= (96 << 20):
        tm_t, th_t = 1024, 512
    else:
        tm_t, th_t = 512, 256
    tm = _pick_m_tile(M, tm_t)
    th, h_pad = _pick_h_tile(H, th_t)
    while _footprint_bytes(tm, th, D, itemsize) > budget:
        if th > 128 and (th // 2) % 128 == 0:
            th //= 2
            h_pad = _round_up(H, th)
        elif tm > 128:
            tm = max(128, ((tm // 2) // 8) * 8)
        else:
            break
    return tm, th, h_pad


def _ffn_kernel(x_ref, w13_ref, b3_ref, w2_ref, b2_ref, o_ref, acc_ref, *, th):
    # x_ref: (tm, D)   w13_ref: (D, 2*th)   b3_ref: (1, th) f32
    # w2_ref: (th, D)  b2_ref: (1, D) f32   o_ref: (tm, D)  acc_ref: (tm, D) f32
    h_idx = pl.program_id(1)

    @pl.when(h_idx == 0)
    def _():
        acc_ref[...] = jnp.zeros_like(acc_ref)

    x = x_ref[...]

    # Single fused MXU pass over the gate+up weights for this H tile.
    r = jnp.dot(x, w13_ref[...], preferred_element_type=jnp.float32)
    g = r[:, :th]
    u = r[:, th:] + b3_ref[...]
    g = g * jax.nn.sigmoid(g)

    # Partial down-projection, accumulated over H tiles in f32.
    h = (g * u).astype(x.dtype)
    acc_ref[...] += jnp.dot(h, w2_ref[...], preferred_element_type=jnp.float32)

    @pl.when(h_idx == pl.num_programs(1) - 1)
    def _():
        o_ref[...] = (acc_ref[...] + b2_ref[...]).astype(o_ref.dtype)


@functools.partial(
    jax.jit,
    static_argnames=("tm", "th", "h_pad", "vmem_limit", "compute_dtype"))
def _feed_forward_impl(x, w1_t, w3_t, b3, w2_t, b2, *, tm, th, h_pad,
                       vmem_limit, compute_dtype):
    B, S, D = x.shape
    H = w1_t.shape[1]
    M = B * S
    out_dtype = x.dtype
    cdt = jnp.dtype(compute_dtype) if compute_dtype is not None else jnp.dtype(x.dtype)

    x2d = x.reshape(M, D).astype(cdt)
    w1c = w1_t.astype(cdt)
    w3c = w3_t.astype(cdt)
    w2c = w2_t.astype(cdt)
    b3c = b3.astype(jnp.float32)
    b2c = b2.astype(jnp.float32)

    if h_pad != H:
        pad = h_pad - H
        w1c = jnp.pad(w1c, ((0, 0), (0, pad)))
        w3c = jnp.pad(w3c, ((0, 0), (0, pad)))
        b3c = jnp.pad(b3c, ((0, pad),))
        w2c = jnp.pad(w2c, ((0, pad), (0, 0)))

    # Fuse gate & up projections; tile-interleaved layout so column block
    # [j*2*th, (j+1)*2*th) = [w1 tile j | w3 tile j] for BlockSpec index j.
    # TODO(synk): in a full model, precompute/cache this fused weight once
    # instead of rebuilding it on every forward call.
    n_h = h_pad // th
    w13 = jnp.concatenate(
        [w1c.reshape(D, n_h, th), w3c.reshape(D, n_h, th)], axis=2
    ).reshape(D, n_h * 2 * th)

    b3_2d = b3c.reshape(1, h_pad)
    b2_2d = b2c.reshape(1, D)

    n_m = pl.cdiv(M, tm)
    grid = (n_m, n_h)

    itemsize = jnp.dtype(cdt).itemsize
    # Weights are re-streamed once per M tile; x read once, out written once.
    weight_bytes = (D * 2 * h_pad + h_pad + h_pad * D + D) * itemsize
    cost = pl.CostEstimate(
        flops=6 * M * D * h_pad,
        transcendentals=M * h_pad,
        bytes_accessed=2 * M * D * itemsize + n_m * weight_bytes,
    )

    out2d = pl.pallas_call(
        functools.partial(_ffn_kernel, th=th),
        out_shape=jax.ShapeDtypeStruct((M, D), out_dtype),
        grid_spec=pltpu.PrefetchScalarGridSpec(
            num_scalar_prefetch=0,
            grid=grid,
            in_specs=[
                pl.BlockSpec((tm, D), lambda i, h: (i, 0)),       # x tile
                pl.BlockSpec((D, 2 * th), lambda i, h: (0, h)),   # fused w1|w3
                pl.BlockSpec((1, th), lambda i, h: (0, h)),       # b3 tile
                pl.BlockSpec((th, D), lambda i, h: (h, 0)),       # w2 tile
                pl.BlockSpec((1, D), lambda i, h: (0, 0)),        # b2
            ],
            out_specs=pl.BlockSpec((tm, D), lambda i, h: (i, 0)),
            scratch_shapes=[pltpu.VMEM((tm, D), jnp.float32)],
        ),
        compiler_params=pltpu.CompilerParams(
            dimension_semantics=("parallel", "arbitrary"),
            vmem_limit_bytes=int(vmem_limit),
        ),
        cost_estimate=cost,
    )(x2d, w13, b3_2d, w2c, b2_2d)

    return out2d.reshape(B, S, D)


def feed_forward(x, w1_t, w3_t, b3, w2_t, b2, *, tm=None, th=None,
                 compute_dtype=None):
    """SwiGLU FFN.  x: (B, S, D); w1_t/w3_t: (D, H); b3: (H,); w2_t: (H, D);
    b2: (D,).  Weights are the torch Linear weights pre-transposed to [in, out].
    Pass compute_dtype=jnp.bfloat16 for full MXU throughput with f32 params
    (f32 accumulation is kept regardless)."""
    B, S, D = x.shape
    H = w1_t.shape[1]
    M = B * S
    cdt = jnp.dtype(compute_dtype) if compute_dtype is not None else jnp.dtype(x.dtype)

    budget = _vmem_budget_bytes()
    tm_a, th_a, h_pad = _choose_tiles(M, D, H, cdt.itemsize, budget)
    if tm is not None:
        tm_a = min(tm, M)
        if tm_a < M:
            tm_a = max(8, (tm_a // 8) * 8)
    if th is not None:
        th_a, h_pad = _pick_h_tile(H, th)

    return _feed_forward_impl(
        x, w1_t, w3_t, b3, w2_t, b2,
        tm=int(tm_a), th=int(th_a), h_pad=int(h_pad),
        vmem_limit=int(budget), compute_dtype=compute_dtype)


def _ref_feed_forward(x, w1_t, w3_t, b3, w2_t, b2):
    g = x @ w1_t
    g = g * jax.nn.sigmoid(g)
    u = x @ w3_t + b3
    return (g * u) @ w2_t + b2


if __name__ == "__main__":
    # Small shapes consistent with the module: batch=2, seq=8, dim=32, hidden=64.
    B, S, D, H = 2, 8, 32, 64
    key = jax.random.PRNGKey(0)
    kx, k1, k2, k3, kb2, kb3 = jax.random.split(key, 6)

    x = jax.random.normal(kx, (B, S, D), dtype=jnp.float32)

    # Deterministic parameter init (torch Linear weight shapes, stored
    # transposed as [in, out] for the kernel).
    scale1 = 1.0 / jnp.sqrt(D)
    scale2 = 1.0 / jnp.sqrt(H)
    w1_t = jax.random.uniform(k1, (D, H), minval=-scale1, maxval=scale1, dtype=jnp.float32)
    w3_t = jax.random.uniform(k3, (D, H), minval=-scale1, maxval=scale1, dtype=jnp.float32)
    b3 = jax.random.uniform(kb3, (H,), minval=-scale1, maxval=scale1, dtype=jnp.float32)
    w2_t = jax.random.uniform(k2, (H, D), minval=-scale2, maxval=scale2, dtype=jnp.float32)
    b2 = jax.random.uniform(kb2, (D,), minval=-scale2, maxval=scale2, dtype=jnp.float32)

    ref = _ref_feed_forward(x, w1_t, w3_t, b3, w2_t, b2)

    # Exact-precision path (compute dtype == input dtype == f32).
    out = jax.block_until_ready(feed_forward(x, w1_t, w3_t, b3, w2_t, b2))
    assert out.shape == (B, S, D)
    assert jnp.allclose(out, ref, atol=1e-4, rtol=1e-4)

    # bf16-operand path (recommended on real shapes for MXU peak); looser tol.
    out_bf16 = jax.block_until_ready(
        feed_forward(x, w1_t, w3_t, b3, w2_t, b2, compute_dtype=jnp.bfloat16))
    assert jnp.allclose(out_bf16, ref, atol=5e-2, rtol=5e-2)

    print("KERNEL_OK")
</pallas_src>

<mosaic_0001>
module attributes {stable_mosaic.version = 11 : i64} {
  func.func @_ffn_kernel(%arg0: i32, %arg1: i32, %arg2: memref<16x32xf32, #tpu.memory_space<vmem>>, %arg3: memref<32x128xf32, #tpu.memory_space<vmem>>, %arg4: memref<1x64xf32, #tpu.memory_space<vmem>>, %arg5: memref<64x32xf32, #tpu.memory_space<vmem>>, %arg6: memref<1x32xf32, #tpu.memory_space<vmem>>, %arg7: memref<16x32xf32, #tpu.memory_space<vmem>>, %arg8: memref<16x32xf32, #tpu.memory_space<vmem>>) attributes {dimension_semantics = [#tpu.dimension_semantics<parallel>, #tpu.dimension_semantics<arbitrary>], iteration_bounds = array<i64: 1, 1>, scalar_prefetch = 0 : i64, scratch_operands = 1 : i64, tpu.core_type = #tpu.core_type<tc>, window_params = [{transform_indices = @transform_0, window_bounds = array<i64: 16, 32>}, {transform_indices = @transform_1, window_bounds = array<i64: 32, 128>}, {transform_indices = @transform_2, window_bounds = array<i64: 1, 64>}, {transform_indices = @transform_3, window_bounds = array<i64: 64, 32>}, {pipeline_mode = #tpu.pipeline_mode<synchronous>, transform_indices = @transform_4, window_bounds = array<i64: 1, 32>}, {transform_indices = @transform_5, window_bounds = array<i64: 16, 32>}]} {
    %c0_i32 = arith.constant 0 : i32
    %0 = arith.cmpi eq, %arg1, %c0_i32 : i32
    %1 = arith.extui %0 : i1 to i32
    %c0_i32_0 = arith.constant 0 : i32
    %2 = arith.cmpi ne, %1, %c0_i32_0 : i32
    scf.if %2 {
      %cst_16 = arith.constant 0.000000e+00 : f32
      %26 = vector.broadcast %cst_16 : f32 to vector<16x32xf32>
      %c0_17 = arith.constant 0 : index
      %c0_18 = arith.constant 0 : index
      %27 = vector.load %arg8[%c0_17, %c0_18] : memref<16x32xf32, #tpu.memory_space<vmem>>, vector<16x32xf32>
      tpu.vector_store %arg8[%c0_17, %c0_18], %26 {strides = array<i32>} : memref<16x32xf32, #tpu.memory_space<vmem>>, vector<16x32xf32>,
    } else {
    }
    %c0 = arith.constant 0 : index
    %c0_1 = arith.constant 0 : index
    %3 = vector.load %arg2[%c0, %c0_1] : memref<16x32xf32, #tpu.memory_space<vmem>>, vector<16x32xf32>
    %c0_2 = arith.constant 0 : index
    %c0_3 = arith.constant 0 : index
    %4 = vector.load %arg3[%c0_2, %c0_3] : memref<32x128xf32, #tpu.memory_space<vmem>>, vector<32x128xf32>
    %cst = arith.constant dense<0.000000e+00> : vector<16x128xf32>
    %5 = tpu.matmul %3, %4, %cst {dimension_numbers = #tpu.dot_dimension_numbers<[1], [0], [0], [1], [0, 0, 1, 1], [], []>} : vector<16x32xf32>, vector<32x128xf32>, vector<16x128xf32> -> vector<16x128xf32>
    %6 = vector.extract_strided_slice %5 {offsets = [0, 0], sizes = [16, 64], strides = [1, 1]} : vector<16x128xf32> to vector<16x64xf32>
    %7 = vector.extract_strided_slice %5 {offsets = [0, 64], sizes = [16, 64], strides = [1, 1]} : vector<16x128xf32> to vector<16x64xf32>
    %c0_4 = arith.constant 0 : index
    %c0_5 = arith.constant 0 : index
    %8 = vector.load %arg4[%c0_4, %c0_5] : memref<1x64xf32, #tpu.memory_space<vmem>>, vector<1x64xf32>
    %9 = vector.broadcast %8 : vector<1x64xf32> to vector<16x64xf32>
    %10 = arith.addf %7, %9 : vector<16x64xf32>
    %11 = arith.negf %6 : vector<16x64xf32>
    %12 = math.exp %11 : vector<16x64xf32>
    %cst_6 = arith.constant 1.000000e+00 : f32
    %13 = vector.broadcast %cst_6 : f32 to vector<16x64xf32>
    %14 = arith.addf %13, %12 : vector<16x64xf32>
    %15 = arith.divf %13, %14 : vector<16x64xf32>
    %16 = arith.mulf %6, %15 : vector<16x64xf32>
    %17 = arith.mulf %16, %10 : vector<16x64xf32>
    %c0_7 = arith.constant 0 : index
    %c0_8 = arith.constant 0 : index
    %18 = vector.load %arg8[%c0_7, %c0_8] : memref<16x32xf32, #tpu.memory_space<vmem>>, vector<16x32xf32>
    %c0_9 = arith.constant 0 : index
    %c0_10 = arith.constant 0 : index
    %19 = vector.load %arg5[%c0_9, %c0_10] : memref<64x32xf32, #tpu.memory_space<vmem>>, vector<64x32xf32>
    %cst_11 = arith.constant dense<0.000000e+00> : vector<16x32xf32>
    %20 = tpu.matmul %17, %19, %cst_11 {dimension_numbers = #tpu.dot_dimension_numbers<[1], [0], [0], [1], [0, 0, 1, 1], [], []>} : vector<16x64xf32>, vector<64x32xf32>, vector<16x32xf32> -> vector<16x32xf32>
    %21 = arith.addf %18, %20 : vector<16x32xf32>
    %c0_12 = arith.constant 0 : index
    %c0_13 = arith.constant 0 : index
    %22 = vector.load %arg8[%c0_12, %c0_13] : memref<16x32xf32, #tpu.memory_space<vmem>>, vector<16x32xf32>
    tpu.vector_store %arg8[%c0_12, %c0_13], %21 {strides = array<i32>} : memref<16x32xf32, #tpu.memory_space<vmem>>, vector<16x32xf32>,
    %c0_i32_14 = arith.constant 0 : i32
    %23 = arith.cmpi eq, %arg1, %c0_i32_14 : i32
    %24 = arith.extui %23 : i1 to i32
    %c0_i32_15 = arith.constant 0 : i32
    %25 = arith.cmpi ne, %24, %c0_i32_15 : i32
    scf.if %25 {
      %c0_16 = arith.constant 0 : index
      %c0_17 = arith.constant 0 : index
      %26 = vector.load %arg8[%c0_16, %c0_17] : memref<16x32xf32, #tpu.memory_space<vmem>>, vector<16x32xf32>
      %c0_18 = arith.constant 0 : index
      %c0_19 = arith.constant 0 : index
      %27 = vector.load %arg6[%c0_18, %c0_19] : memref<1x32xf32, #tpu.memory_space<vmem>>, vector<1x32xf32>
      %28 = vector.broadcast %27 : vector<1x32xf32> to vector<16x32xf32>
      %29 = arith.addf %26, %28 : vector<16x32xf32>
      %c0_20 = arith.constant 0 : index
      %c0_21 = arith.constant 0 : index
      %30 = vector.load %arg7[%c0_20, %c0_21] : memref<16x32xf32, #tpu.memory_space<vmem>>, vector<16x32xf32>
      tpu.vector_store %arg7[%c0_20, %c0_21], %29 {strides = array<i32>} : memref<16x32xf32, #tpu.memory_space<vmem>>, vector<16x32xf32>,
    } else {
    }
    return
  }
  func.func @transform_0(%arg0: i32, %arg1: i32) -> (i32, i32) {
    %c0_i32 = arith.constant 0 : i32
    %c0_i32_0 = arith.constant 0 : i32
    return %arg0, %c0_i32 : i32, i32
  }
  func.func @transform_1(%arg0: i32, %arg1: i32) -> (i32, i32) {
    %c0_i32 = arith.constant 0 : i32
    %c0_i32_0 = arith.constant 0 : i32
    return %c0_i32, %arg1 : i32, i32
  }
  func.func @transform_2(%arg0: i32, %arg1: i32) -> (i32, i32) {
    %c0_i32 = arith.constant 0 : i32
    %c0_i32_0 = arith.constant 0 : i32
    return %c0_i32, %arg1 : i32, i32
  }
  func.func @transform_3(%arg0: i32, %arg1: i32) -> (i32, i32) {
    %c0_i32 = arith.constant 0 : i32
    %c0_i32_0 = arith.constant 0 : i32
    return %arg1, %c0_i32 : i32, i32
  }
  func.func @transform_4(%arg0: i32, %arg1: i32) -> (i32, i32) {
    %c0_i32 = arith.constant 0 : i32
    %c0_i32_0 = arith.constant 0 : i32
    %c0_i32_1 = arith.constant 0 : i32
    return %c0_i32, %c0_i32_0 : i32, i32
  }
  func.func @transform_5(%arg0: i32, %arg1: i32) -> (i32, i32) {
    %c0_i32 = arith.constant 0 : i32
    %c0_i32_0 = arith.constant 0 : i32
    return %arg0, %c0_i32 : i32, i32
  }
}

</mosaic_0001>

<llo_original>
// kernel: _feed_forward_impl.1
$region0: #{_feed_forward_impl.1}
  #allocation0 [shape = 'u32[]', space=smem, size = 0x4, offset = 0x4, fixed_abs, tag = 'smem constant byte address 0x4 - core index']
  #allocation1 [shape = 'u32[144,128]{1,0:T(1,128)}', space=vmem, size = 0x12000, scoped, tag = 'internal scratch']
  #allocation2 [shape = 'f32[16,32]{1,0:T(8,128)}', space=vmem, size = 0x2000, scoped, tag = 'scratch operand']
  %s0 = inlined_call_operand.vmem [shape: f32[16,32], index: 0, kind: input, shape index: {}]
  %s1 = inlined_call_operand.vmem [shape: f32[32,128], index: 1, kind: input, shape index: {}]
  %s2 = inlined_call_operand.vmem [shape: f32[1,64], index: 2, kind: input, shape index: {}]
  %s3 = inlined_call_operand.vmem [shape: f32[64,32], index: 3, kind: input, shape index: {}]
  %s4 = inlined_call_operand.vmem [shape: f32[1,32], index: 4, kind: input, shape index: {}]
  %s5 = inlined_call_operand.hbm [shape: f32[16,32], index: 5, kind: output, shape index: {}]
  %s6 = sld [smem:[#allocation0]]
  $region38: #{_feed_forward_impl.1} parent=0
    _
  %s8 = ssub.s32 1, %s6
  %s9 = scalar_select 0, %s8, %s6
  $region1: #{_feed_forward_impl.1} parent=0
    #allocation3 [shape = 'u8[8192]{0}', space=vmem, size = 0x2000, scoped, tag = 'output window, operand 0, single buffered']
    #allocation4 [shape = 's32[1]{0}', space=sflag, size = 0x4, scoped, tag = 'scoped memory for _feed_forward_impl.1']
    %10 = vsyncpa [#allocation4], 0
    // Predicated region
    $region2: #{_feed_forward_impl.1} parent=1 // pred_check
      _
    $region3: #{_feed_forward_impl.1} parent=1 // pred_check_branch
      %12 = sbr.rel (0) target = $region5
    $region4: #{_feed_forward_impl.1} parent=1 // pred_region
      _
    $region5: #{_feed_forward_impl.1} parent=1 // pred_fallthru
      _
    // Predicated region
    $region6: #{_feed_forward_impl.1} parent=1 // pred_check
      _
    $region7: #{_feed_forward_impl.1} parent=1 // pred_check_branch
      %14 = sbr.rel (0) target = $region9
    $region8: #{_feed_forward_impl.1} parent=1 // pred_region
      _
    $region9: #{_feed_forward_impl.1} parent=1 // pred_fallthru
      _
    // Predicated region
    $region10: #{_feed_forward_impl.1} parent=1 // pred_check
      _
    $region11: #{_feed_forward_impl.1} parent=1 // pred_check_branch
      %16 = sbr.rel (0) target = $region13
    $region12: #{_feed_forward_impl.1} parent=1 // pred_region
      _
    $region13: #{_feed_forward_impl.1} parent=1 // pred_fallthru
      _
    // Predicated region
    $region14: #{_feed_forward_impl.1} parent=1 // pred_check
      _
    $region15: #{_feed_forward_impl.1} parent=1 // pred_check_branch
      %18 = sbr.rel (0) target = $region17
    $region16: #{_feed_forward_impl.1} parent=1 // pred_region
      _
    $region17: #{_feed_forward_impl.1} parent=1 // pred_fallthru
      _
    // Predicated region
    $region18: #{_feed_forward_impl.1} parent=1 // pred_check
      _
    $region19: #{_feed_forward_impl.1} parent=1 // pred_check_branch
      %20 = sbr.rel (0) target = $region21
    $region20: #{_feed_forward_impl.1} parent=1 // pred_region
      _
    $region21: #{_feed_forward_impl.1} parent=1 // pred_fallthru
      _
    %p21 = scmp.eq.s32.totalorder 0, 0
    // Predicated region
    $region22: #{_feed_forward_impl.1} parent=1 // pred_check
      %p22 = pneg %p21
    $region23: #{_feed_forward_impl.1} parent=1 // pred_check_branch
      %24 = sbr.rel (%p22) target = $region25
    $region24: #{_feed_forward_impl.1} parent=1 // pred_region
      %vm25 = vcmask 261120
      %26 = vst.msk [vmem:[#allocation2] sm:$0xff] %vm25, 0.0
      %27 = vst.msk [vmem:[#allocation2 + $0x8] sm:$0xff] %vm25, 0.0
    $region25: #{_feed_forward_impl.1} parent=1 // pred_fallthru
      _
    %v28 = vld [vmem:[%s0] sm:$0xff]
    %v29 = vld [vmem:[%s0 + $0x8] sm:$0xff]
    %v30 = vld [vmem:[%s1] sm:$0xff]
    %v31 = vld [vmem:[%s1 + $0x8] sm:$0xff]
    %v32 = vld [vmem:[%s1 + $0x10] sm:$0xff]
    %v33 = vld [vmem:[%s1 + $0x18] sm:$0xff]
    %vm34 = vcmask 261120
    %v36 = vsel %vm34, %v28, 0
    %v39 = vsel %vm34, %v29, 0
    %41 = vmatprep.subr.mxu0 0.0
    %42 = vmatpush1.msra.mxu0 %v30
    %43 = vmatprep.subr.mxu0 0.0
    %44 = vmatpush1.msra.mxu0 %v31
    %45 = vmatprep.subr.mxu0 0.0
    %46 = vmatpush1.msra.mxu0 %v32
    %47 = vmatprep.subr.mxu0 0.0
    %48 = vmatpush1.msra.mxu0 %v33
    %49 = vmatprep.subr.mxu0 0.0
    %50 = vmatpush1.msra.mxu0 0.0
    %51 = vmatprep.subr.mxu0 0.0
    %52 = vmatpush1.msra.mxu0 0.0
    %53 = vmatprep.subr.mxu0 0.0
    %54 = vmatpush1.msra.mxu0 0.0
    %55 = vmatprep.subr.mxu0 0.0
    %56 = vmatpush1.msra.mxu0 0.0
    %57 = vmatprep.subr.mxu0 0.0
    %58 = vmatpush1.msra.mxu0 0.0
    %59 = vmatprep.subr.mxu0 0.0
    %60 = vmatpush1.msra.mxu0 0.0
    %61 = vmatprep.subr.mxu0 0.0
    %62 = vmatpush1.msra.mxu0 0.0
    %63 = vmatprep.subr.mxu0 0.0
    %64 = vmatpush1.msra.mxu0 0.0
    %65 = vmatprep.subr.mxu0 0.0
    %66 = vmatpush1.msra.mxu0 0.0
    %67 = vmatprep.subr.mxu0 0.0
    %68 = vmatpush1.msra.mxu0 0.0
    %69 = vmatprep.subr.mxu0 0.0
    %70 = vmatpush1.msra.mxu0 0.0
    %71 = vmatprep.subr.mxu0 0.0
    %72 = vmatpush1.msra.mxu0 0.0
    %73 = vmatprep.subr.mxu0 0.0
    %74 = vmatpush1.msra.mxu0 0.0
    %75 = vmatprep.subr.mxu0 0.0
    %76 = vmatpush1.msra.mxu0 0.0
    %77 = vmatprep.subr.mxu0 0.0
    %78 = vmatpush1.msra.mxu0 0.0
    %79 = vmatprep.subr.mxu0 0.0
    %80 = vmatpush1.msra.mxu0 0.0
    %81 = vmatprep.subr.mxu0 0.0
    %82 = vmatpush1.msra.mxu0 0.0
    %83 = vmatprep.subr.mxu0 0.0
    %84 = vmatpush1.msra.mxu0 0.0
    %85 = vmatprep.subr.mxu0 0.0
    %86 = vmatpush1.msra.mxu0 0.0
    %87 = vmatprep.subr.mxu0 0.0
    %88 = vmatpush1.msra.mxu0 0.0
    %89 = vmatprep.subr.mxu0 0.0
    %90 = vmatpush1.msra.mxu0 0.0
    %91 = vmatprep.subr.mxu0 0.0
    %92 = vmatpush1.msra.mxu0 0.0
    %93 = vmatprep.subr.mxu0 0.0
    %94 = vmatpush1.msra.mxu0 0.0
    %95 = vmatprep.subr.mxu0 0.0
    %96 = vmatpush1.msra.mxu0 0.0
    %97 = vmatprep.subr.mxu0 0.0
    %98 = vmatpush1.msra.mxu0 0.0
    %99 = vmatprep.subr.mxu0 0.0
    %100 = vmatpush1.msra.mxu0 0.0
    %101 = vmatprep.subr.mxu0 0.0
    %102 = vmatpush1.msra.mxu0 0.0
    %103 = vmatprep.subr.mxu0 0.0
    %104 = vmatpush1.msra.mxu0 0.0
    %105 = vmatprep.mubr.f32.mxu0 0.0
    %106 = vmatmul.mubr.f32.gmra.mrb[0].mxu0 %v36
    %v107 = vpop.f32.mrb[0].mxu0
    %v108 = vadd.f32 0.0, %v107
    %v109 = vpop.f32.mrb[0].mxu0
    %110 = vmatprep.mubr.f32.mxu0 0.0
    %111 = vmatmul.mubr.f32.gmra.mrb[0].mxu0 %v39
    %v112 = vpop.f32.mrb[0].mxu0
    %v113 = vadd.f32 0.0, %v112
    %v114 = vpop.f32.mrb[0].mxu0
    %115 = vdwg.mxu0
    %v116 = vld [vmem:[%s2] sm:$0x1]
    %v118 = vlaneseq
    %v119 = vshrl.u32 %v118, 7
    %v120 = vsub.s32 0, %v119
    %v121 = vrot.slane %v116, %v120
    %122 = vrot.lane.b32.xlu0 %v121, 64
    %v123 = vpop.permute.xlu0 %122
    %v125 = vadd.f32 %v108, %v123
    %v126 = vadd.f32 %v113, %v123
    %v127 = vxor.u32 %v108, 2147483648
    %v128 = vxor.u32 %v113, 2147483648
    %v129 = vmul.f32 %v127, 1.442695
    %v130 = vpow.pop %v129
    %v131 = vmul.f32 %v128, 1.442695
    %v132 = vpow.pop %v131
    %v133 = vadd.f32 %v130, 1.0
    %v134 = vadd.f32 %v132, 1.0
    %v135 = vrcp.pop %v133
    %v136 = vmul.f32 1.0, %v135
    %v137 = vrcp.pop %v134
    %v138 = vmul.f32 1.0, %v137
    %v139 = vmul.f32 %v108, %v136
    %v140 = vmul.f32 %v113, %v138
    %143 = vrot.lane.b32.xlu0 %v125, 64
    %v144 = vpop.permute.xlu0 %143
    %145 = vrot.lane.b32.xlu0 %v126, 64
    %v146 = vpop.permute.xlu0 %145
    %v149 = vmul.f32 %v139, %v144
    %v150 = vmul.f32 %v140, %v146
    %v151 = vld [vmem:[#allocation2] sm:$0xff]
    %v152 = vld [vmem:[#allocation2 + $0x8] sm:$0xff]
    %v153 = vld [vmem:[%s3] sm:$0xff]
    %v154 = vld [vmem:[%s3 + $0x8] sm:$0xff]
    %v155 = vld [vmem:[%s3 + $0x10] sm:$0xff]
    %v156 = vld [vmem:[%s3 + $0x18] sm:$0xff]
    %v157 = vld [vmem:[%s3 + $0x20] sm:$0xff]
    %v158 = vld [vmem:[%s3 + $0x28] sm:$0xff]
    %v159 = vld [vmem:[%s3 + $0x30] sm:$0xff]
    %v160 = vld [vmem:[%s3 + $0x38] sm:$0xff]
    %vm161 = vcmask 523264
    %v163 = vsel %vm161, %v149, 0
    %v166 = vsel %vm161, %v150, 0
    %168 = vmatprep.subr.mxu0 0.0
    %169 = vmatpush1.msra.mxu0 %v153
    %170 = vmatprep.subr.mxu0 0.0
    %171 = vmatpush1.msra.mxu0 %v154
    %172 = vmatprep.subr.mxu0 0.0
    %173 = vmatpush1.msra.mxu0 %v155
    %174 = vmatprep.subr.mxu0 0.0
    %175 = vmatpush1.msra.mxu0 %v156
    %176 = vmatprep.subr.mxu0 0.0
    %177 = vmatpush1.msra.mxu0 %v157
    %178 = vmatprep.subr.mxu0 0.0
    %179 = vmatpush1.msra.mxu0 %v158
    %180 = vmatprep.subr.mxu0 0.0
    %181 = vmatpush1.msra.mxu0 %v159
    %182 = vmatprep.subr.mxu0 0.0
    %183 = vmatpush1.msra.mxu0 %v160
    %184 = vmatprep.subr.mxu0 0.0
    %185 = vmatpush1.msra.mxu0 0.0
    %186 = vmatprep.subr.mxu0 0.0
    %187 = vmatpush1.msra.mxu0 0.0
    %188 = vmatprep.subr.mxu0 0.0
    %189 = vmatpush1.msra.mxu0 0.0
    %190 = vmatprep.subr.mxu0 0.0
    %191 = vmatpush1.msra.mxu0 0.0
    %192 = vmatprep.subr.mxu0 0.0
    %193 = vmatpush1.msra.mxu0 0.0
    %194 = vmatprep.subr.mxu0 0.0
    %195 = vmatpush1.msra.mxu0 0.0
    %196 = vmatprep.subr.mxu0 0.0
    %197 = vmatpush1.msra.mxu0 0.0
    %198 = vmatprep.subr.mxu0 0.0
    %199 = vmatpush1.msra.mxu0 0.0
    %200 = vmatprep.subr.mxu0 0.0
    %201 = vmatpush1.msra.mxu0 0.0
    %202 = vmatprep.subr.mxu0 0.0
    %203 = vmatpush1.msra.mxu0 0.0
    %204 = vmatprep.subr.mxu0 0.0
    %205 = vmatpush1.msra.mxu0 0.0
    %206 = vmatprep.subr.mxu0 0.0
    %207 = vmatpush1.msra.mxu0 0.0
    %208 = vmatprep.subr.mxu0 0.0
    %209 = vmatpush1.msra.mxu0 0.0
    %210 = vmatprep.subr.mxu0 0.0
    %211 = vmatpush1.msra.mxu0 0.0
    %212 = vmatprep.subr.mxu0 0.0
    %213 = vmatpush1.msra.mxu0 0.0
    %214 = vmatprep.subr.mxu0 0.0
    %215 = vmatpush1.msra.mxu0 0.0
    %216 = vmatprep.subr.mxu0 0.0
    %217 = vmatpush1.msra.mxu0 0.0
    %218 = vmatprep.subr.mxu0 0.0
    %219 = vmatpush1.msra.mxu0 0.0
    %220 = vmatprep.subr.mxu0 0.0
    %221 = vmatpush1.msra.mxu0 0.0
    %222 = vmatprep.subr.mxu0 0.0
    %223 = vmatpush1.msra.mxu0 0.0
    %224 = vmatprep.subr.mxu0 0.0
    %225 = vmatpush1.msra.mxu0 0.0
    %226 = vmatprep.subr.mxu0 0.0
    %227 = vmatpush1.msra.mxu0 0.0
    %228 = vmatprep.subr.mxu0 0.0
    %229 = vmatpush1.msra.mxu0 0.0
    %230 = vmatprep.subr.mxu0 0.0
    %231 = vmatpush1.msra.mxu0 0.0
    %232 = vmatprep.mubr.f32.mxu0 0.0
    %233 = vmatmul.mubr.f32.gmra.mrb[0].mxu0 %v163
    %v234 = vpop.f32.mrb[0].mxu0
    %v235 = vadd.f32 0.0, %v234
    %v236 = vpop.f32.mrb[0].mxu0
    %237 = vmatprep.mubr.f32.mxu0 0.0
    %238 = vmatmul.mubr.f32.gmra.mrb[0].mxu0 %v166
    %v239 = vpop.f32.mrb[0].mxu0
    %v240 = vadd.f32 0.0, %v239
    %v241 = vpop.f32.mrb[0].mxu0
    %242 = vdwg.mxu0
    %v243 = vadd.f32 %v151, %v235
    %v244 = vadd.f32 %v152, %v240
    %245 = vst.msk [vmem:[#allocation2] sm:$0xff] %vm34, %v243
    %246 = vst.msk [vmem:[#allocation2 + $0x8] sm:$0xff] %vm34, %v244
    // Predicated region
    $region26: #{_feed_forward_impl.1} parent=1 // pred_check
      %p247 = pneg %p21
    $region27: #{_feed_forward_impl.1} parent=1 // pred_check_branch
      %249 = sbr.rel (%p247) target = $region29
    $region28: #{_feed_forward_impl.1} parent=1 // pred_region
      %v250 = vld [vmem:[#allocation2] sm:$0xff]
      %v251 = vld [vmem:[#allocation2 + $0x8] sm:$0xff]
      %v252 = vld [vmem:[%s4] sm:$0x1]
      %v254 = vlaneseq
      %v255 = vshrl.u32 %v254, 7
      %v256 = vsub.s32 0, %v255
      %v257 = vrot.slane %v252, %v256
      %v259 = vadd.f32 %v250, %v257
      %v260 = vadd.f32 %v251, %v257
      %261 = vst.msk [vmem:[#allocation3] sm:$0xff] %vm34, %v259
      %262 = vst.msk [vmem:[#allocation3 + $0x8] sm:$0xff] %vm34, %v260
    $region29: #{_feed_forward_impl.1} parent=1 // pred_fallthru
      _
    // Predicated region
    $region30: #{_feed_forward_impl.1} parent=1 // pred_check
      _
    $region31: #{_feed_forward_impl.1} parent=1 // pred_check_branch
      %264 = sbr.rel (0) target = $region33
    $region32: #{_feed_forward_impl.1} parent=1 // pred_region
      %s266 = ssub.s32 256, 256
      %267 = vsyncadd [#allocation4], %s266
      %s268 = sshll.u32 [#allocation3], 4
      %s269 = int_to_ptr.vmem [resolvable:$true] %s268
      %274 = dma.vmem_to_hbm [thread:$0]  %s269, 256, %s5, [#allocation4], 128, 128, 8
    $region33: #{_feed_forward_impl.1} parent=1 // pred_fallthru
      _
    // Predicated region
    $region34: #{_feed_forward_impl.1} parent=1 // pred_check
      _
    $region35: #{_feed_forward_impl.1} parent=1 // pred_check_branch
      %276 = sbr.rel (0) target = $region37
    $region36: #{_feed_forward_impl.1} parent=1 // pred_region
      %277 = dma.done [#allocation4], 256
    $region37: #{_feed_forward_impl.1} parent=1 // pred_fallthru
      _
    %278 = vsyncpa [#allocation4], 1

</llo_original>
